<compile_context>
chip_gen: v7x
topology: tpu7x:2x2x1
jax: 0.10.0
libtpu: 0.0.40
codegen_flags: <defaults>
</compile_context>

<pallas_src>
import functools
import math

import jax
import jax.numpy as jnp
from jax.experimental import pallas as pl
from jax.experimental.pallas import tpu as pltpu


# ----------------------------------------------------------------------------
# Generation-aware VMEM limit
# ----------------------------------------------------------------------------
@functools.lru_cache(maxsize=None)
def _vmem_limit_bytes():
    """~3/4 of physical VMEM, capped at 100 MiB; conservative fallback = v7x."""
    cap = None
    try:
        info = pltpu.get_tpu_info()
        cap = getattr(info, "vmem_capacity_bytes", None)
    except Exception:
        cap = None
    if not cap:
        cap = 64 * 1024 * 1024  # v7x physical (smallest of v5e/v6e/v7x)
    return int(min(cap * 3 // 4, 100 * 1024 * 1024))


def _compiler_params():
    return pltpu.CompilerParams(vmem_limit_bytes=_vmem_limit_bytes())


def _check_fits(*arrays):
    """Loose guard: the fused single-block kernels keep everything resident in VMEM."""
    nbytes = sum(math.prod(a.shape) * a.dtype.itemsize for a in arrays)
    if 8 * nbytes > _vmem_limit_bytes():  # 8x headroom for f32 intermediates
        raise ValueError(
            "fused single-block EmbedEncoder kernels require all operands to fit "
            "VMEM; inputs too large for this shape (a tiled variant is needed)")


# ----------------------------------------------------------------------------
# In-kernel LayerNorm (module's custom variant: unbiased std, eps added to std)
# ----------------------------------------------------------------------------
def _layer_norm(x, gain, bias, eps):
    features = x.shape[-1]
    x32 = x.astype(jnp.float32)
    mean = jnp.mean(x32, axis=-1, keepdims=True)
    diff = x32 - mean
    var = jnp.sum(diff * diff, axis=-1, keepdims=True) * jnp.float32(1.0 / (features - 1))
    inv = 1.0 / (jnp.sqrt(var) + jnp.float32(eps))     # exact reciprocal (per feedback)
    return gain.astype(jnp.float32) * (diff * inv) + bias.astype(jnp.float32)


# ----------------------------------------------------------------------------
# Kernel 1: embed  (concat fused into three partial dots)
# ----------------------------------------------------------------------------
def _embed_kernel(s_ref, a_ref, sp_ref, ws_ref, wa_ref, wsp_ref, b_ref, o_ref):
    B, S, d_obs = s_ref.shape
    d_act = a_ref.shape[-1]
    D = o_ref.shape[-1]
    # cat([s, a, sp], -1) @ W + b  ==  s @ W_s + a @ W_a + sp @ W_sp + b
    y = jnp.dot(s_ref[...].reshape(B * S, d_obs), ws_ref[...],
                preferred_element_type=jnp.float32)
    y = y + jnp.dot(a_ref[...].reshape(B * S, d_act), wa_ref[...],
                    preferred_element_type=jnp.float32)
    y = y + jnp.dot(sp_ref[...].reshape(B * S, d_obs), wsp_ref[...],
                    preferred_element_type=jnp.float32)
    y = y + b_ref[...].astype(jnp.float32)
    o_ref[...] = y.reshape(B, S, D).astype(o_ref.dtype)


@functools.lru_cache(maxsize=None)
def _build_embed(B, S, D, dtype_name):
    return pl.pallas_call(
        _embed_kernel,
        out_shape=jax.ShapeDtypeStruct((B, S, D), jnp.dtype(dtype_name)),
        compiler_params=_compiler_params(),
    )


# ----------------------------------------------------------------------------
# Kernel 2: attention sublayer  (LN1 + QKV proj + attention + O proj + residual)
# ----------------------------------------------------------------------------
def _attn_sublayer_kernel(x_ref, g_ref, b_ref, wqkv_ref, bqkv_ref, wo_ref, bo_ref,
                          o_ref, *, n_heads, eps):
    B, S, D = x_ref.shape
    dk = D // n_heads
    scale = 1.0 / math.sqrt(dk)

    x = x_ref[...]
    y = _layer_norm(x, g_ref[...], b_ref[...], eps)                 # (B, S, D) f32

    qkv = jnp.dot(y.reshape(B * S, D), wqkv_ref[...],
                  preferred_element_type=jnp.float32)
    qkv = (qkv + bqkv_ref[...].astype(jnp.float32)).reshape(B, S, 3 * D)
    q, k, v = qkv[..., :D], qkv[..., D:2 * D], qkv[..., 2 * D:]

    heads = []
    for h in range(n_heads):                                        # static unroll
        lo, hi = h * dk, (h + 1) * dk
        qh, kh, vh = q[..., lo:hi], k[..., lo:hi], v[..., lo:hi]
        s = jnp.einsum("bqd,bkd->bqk", qh, kh,
                       preferred_element_type=jnp.float32) * jnp.float32(scale)
        m = jnp.max(s, axis=-1, keepdims=True)
        e = jnp.exp(s - m)
        p = e * pl.reciprocal(jnp.sum(e, axis=-1, keepdims=True), approx=True)
        heads.append(jnp.einsum("bqk,bkd->bqd", p, vh,
                                preferred_element_type=jnp.float32))
    attn_out = jnp.concatenate(heads, axis=-1)                      # (B, S, D) lane-dense

    proj = jnp.dot(attn_out.reshape(B * S, D), wo_ref[...],
                   preferred_element_type=jnp.float32)
    proj = proj + bo_ref[...].astype(jnp.float32)
    o_ref[...] = (x.astype(jnp.float32) + proj.reshape(B, S, D)).astype(o_ref.dtype)


@functools.lru_cache(maxsize=None)
def _build_attn_sublayer(B, S, D, n_heads, eps, dtype_name):
    kernel = functools.partial(_attn_sublayer_kernel, n_heads=n_heads, eps=eps)
    return pl.pallas_call(
        kernel,
        out_shape=jax.ShapeDtypeStruct((B, S, D), jnp.dtype(dtype_name)),
        compiler_params=_compiler_params(),
    )


# ----------------------------------------------------------------------------
# Kernel 3: FFN sublayer  (LN2 + w1 + ReLU + w2 + residual)
# ----------------------------------------------------------------------------
def _ffn_sublayer_kernel(x_ref, g_ref, b_ref, w1_ref, b1_ref, w2_ref, b2_ref,
                         o_ref, *, eps):
    B, S, D = x_ref.shape
    x = x_ref[...]
    y = _layer_norm(x, g_ref[...], b_ref[...], eps).reshape(B * S, D)
    h = jnp.dot(y, w1_ref[...], preferred_element_type=jnp.float32)
    h = jnp.maximum(h + b1_ref[...].astype(jnp.float32), 0.0)
    out = jnp.dot(h, w2_ref[...], preferred_element_type=jnp.float32)
    out = out + b2_ref[...].astype(jnp.float32)
    o_ref[...] = (x.astype(jnp.float32) + out.reshape(B, S, D)).astype(o_ref.dtype)


@functools.lru_cache(maxsize=None)
def _build_ffn_sublayer(B, S, D, eps, dtype_name):
    kernel = functools.partial(_ffn_sublayer_kernel, eps=eps)
    return pl.pallas_call(
        kernel,
        out_shape=jax.ShapeDtypeStruct((B, S, D), jnp.dtype(dtype_name)),
        compiler_params=_compiler_params(),
    )


# ----------------------------------------------------------------------------
# Kernel 4: final LayerNorm
# ----------------------------------------------------------------------------
def _final_ln_kernel(x_ref, g_ref, b_ref, o_ref, *, eps):
    o_ref[...] = _layer_norm(x_ref[...], g_ref[...], b_ref[...], eps).astype(o_ref.dtype)


@functools.lru_cache(maxsize=None)
def _build_final_ln(B, S, D, eps, dtype_name):
    kernel = functools.partial(_final_ln_kernel, eps=eps)
    return pl.pallas_call(
        kernel,
        out_shape=jax.ShapeDtypeStruct((B, S, D), jnp.dtype(dtype_name)),
        compiler_params=_compiler_params(),
    )


# ----------------------------------------------------------------------------
# EmbedEncoder forward (Pallas) and pure-JAX reference
# ----------------------------------------------------------------------------
def embed_encoder_forward(datum, params, n_heads, eps=1e-6):
    # torch.cat([s, a, sp], dim=-1).float() -- the cast; the concat itself is
    # fused into the embed kernel as three partial dots.
    s = datum["context_obs"].astype(jnp.float32)
    a = datum["context_act"].astype(jnp.float32)
    sp = datum["context_obs_prime"].astype(jnp.float32)
    B, S, _ = s.shape
    D = params["embed_w_s"].shape[1]
    dt = s.dtype.name
    eps = float(eps)

    _check_fits(s, a, sp, params["embed_w_s"], params["embed_w_a"], params["embed_w_sp"])
    x = _build_embed(B, S, D, dt)(
        s, a, sp,
        params["embed_w_s"], params["embed_w_a"], params["embed_w_sp"],
        params["embed_b"])

    attn_fn = _build_attn_sublayer(B, S, D, n_heads, eps, dt)
    ffn_fn = _build_ffn_sublayer(B, S, D, eps, dt)
    for lp in params["layers"]:
        _check_fits(x, lp["wqkv"], lp["wo"], lp["w1"], lp["w2"])
        # SublayerConnection 0: x + self_attn(norm(x))   (dropout == identity, eval mode)
        x = attn_fn(x, lp["ln1_a"], lp["ln1_b"], lp["wqkv"], lp["bqkv"],
                    lp["wo"], lp["bo"])
        # SublayerConnection 1: x + ffn(norm(x))
        x = ffn_fn(x, lp["ln2_a"], lp["ln2_b"], lp["w1"], lp["b1"],
                   lp["w2"], lp["b2"])

    return _build_final_ln(B, S, D, eps, dt)(x, params["ln_f_a"], params["ln_f_b"])


def _layer_norm_ref(x, gain, bias, eps):
    mean = jnp.mean(x, axis=-1, keepdims=True)
    std = jnp.std(x, axis=-1, keepdims=True, ddof=1)
    return gain * (x - mean) / (std + eps) + bias


def embed_encoder_ref(datum, params, n_heads, eps=1e-6):
    s = datum["context_obs"].astype(jnp.float32)
    a = datum["context_act"].astype(jnp.float32)
    sp = datum["context_obs_prime"].astype(jnp.float32)
    x = jnp.concatenate([s, a, sp], axis=-1)
    w = jnp.concatenate([params["embed_w_s"], params["embed_w_a"],
                         params["embed_w_sp"]], axis=0)
    x = x @ w + params["embed_b"]
    B, S, D = x.shape
    dk = D // n_heads
    for lp in params["layers"]:
        y = _layer_norm_ref(x, lp["ln1_a"], lp["ln1_b"], eps)
        qkv = y @ lp["wqkv"] + lp["bqkv"]
        q, k, v = qkv[..., :D], qkv[..., D:2 * D], qkv[..., 2 * D:]

        def split(t):
            return t.reshape(B, S, n_heads, dk).transpose(0, 2, 1, 3)

        sc = jnp.einsum("bhqd,bhkd->bhqk", split(q), split(k)) / math.sqrt(dk)
        p = jax.nn.softmax(sc, axis=-1)
        o = jnp.einsum("bhqk,bhkd->bhqd", p, split(v))
        o = o.transpose(0, 2, 1, 3).reshape(B, S, D)
        x = x + (o @ lp["wo"] + lp["bo"])

        y = _layer_norm_ref(x, lp["ln2_a"], lp["ln2_b"], eps)
        h = jnp.maximum(y @ lp["w1"] + lp["b1"], 0.0)
        x = x + (h @ lp["w2"] + lp["b2"])
    return _layer_norm_ref(x, params["ln_f_a"], params["ln_f_b"], eps)


# ----------------------------------------------------------------------------
# Parameter construction (LayerNorm: a_2 = ones, b_2 = zeros, as in the module;
# QKV weights stored fused, embed weight stored as obs/act/obs' row blocks)
# ----------------------------------------------------------------------------
def init_params(key, d_obs, d_act, d_model, d_ff, n_layers):
    def dense(k, fan_in, fan_out):
        kw, kb = jax.random.split(k)
        w = jax.random.normal(kw, (fan_in, fan_out), jnp.float32) / math.sqrt(fan_in)
        b = jax.random.normal(kb, (1, fan_out), jnp.float32) * 0.01
        return w, b

    d_in = 2 * d_obs + d_act
    keys = iter(jax.random.split(key, 1 + 4 * n_layers))

    ew, eb = dense(next(keys), d_in, d_model)
    ones = lambda n: jnp.ones((1, n), jnp.float32)
    zeros = lambda n: jnp.zeros((1, n), jnp.float32)

    layers = []
    for _ in range(n_layers):
        wqkv, bqkv = dense(next(keys), d_model, 3 * d_model)
        wo, bo = dense(next(keys), d_model, d_model)
        w1, b1 = dense(next(keys), d_model, d_ff)
        w2, b2 = dense(next(keys), d_ff, d_model)
        layers.append(dict(
            ln1_a=ones(d_model), ln1_b=zeros(d_model),
            wqkv=wqkv, bqkv=bqkv, wo=wo, bo=bo,
            ln2_a=ones(d_model), ln2_b=zeros(d_model),
            w1=w1, b1=b1, w2=w2, b2=b2,
        ))
    return dict(
        embed_w_s=ew[:d_obs],
        embed_w_a=ew[d_obs:d_obs + d_act],
        embed_w_sp=ew[d_obs + d_act:],
        embed_b=eb,
        layers=layers,
        ln_f_a=ones(d_model), ln_f_b=zeros(d_model),
    )


if __name__ == "__main__":
    key = jax.random.PRNGKey(0)
    B, S = 2, 8                    # batch, number of context points
    d_obs, d_act = 12, 4           # d_in = 12 + 4 + 12 = 28
    d_model, n_heads, d_ff, n_layers = 128, 4, 256, 2   # 128 keeps the lane dim dense
    eps = 1e-6

    k_obs, k_act, k_obsp, k_par = jax.random.split(key, 4)
    datum = {
        "context_obs": jax.random.normal(k_obs, (B, S, d_obs), dtype=jnp.float32),
        "context_act": jax.random.normal(k_act, (B, S, d_act), dtype=jnp.float32),
        "context_obs_prime": jax.random.normal(k_obsp, (B, S, d_obs), dtype=jnp.float32),
    }
    params = init_params(k_par, d_obs, d_act, d_model, d_ff, n_layers)

    out = embed_encoder_forward(datum, params, n_heads, eps=eps)
    out = jax.block_until_ready(out)

    ref = embed_encoder_ref(datum, params, n_heads, eps=eps)
    assert out.shape == (B, S, d_model)
    # Approximation budget: pl.reciprocal(approx=True) is only used for the softmax
    # denominator (LayerNorm now uses an exact reciprocal), plus MXU-vs-XLA matmul
    # precision differences -> much tighter tolerance than the previous version.
    assert jnp.allclose(out, ref, atol=2e-2, rtol=2e-2), "mismatch vs pure-JAX reference"
    print("KERNEL_OK")
</pallas_src>

<mosaic_0001>
module attributes {stable_mosaic.version = 11 : i64} {
  func.func @_embed_kernel(%arg0: memref<2x8x12xf32, #tpu.memory_space<vmem>>, %arg1: memref<2x8x4xf32, #tpu.memory_space<vmem>>, %arg2: memref<2x8x12xf32, #tpu.memory_space<vmem>>, %arg3: memref<12x128xf32, #tpu.memory_space<vmem>>, %arg4: memref<4x128xf32, #tpu.memory_space<vmem>>, %arg5: memref<12x128xf32, #tpu.memory_space<vmem>>, %arg6: memref<1x128xf32, #tpu.memory_space<vmem>>, %arg7: memref<2x8x128xf32, #tpu.memory_space<vmem>>) attributes {dimension_semantics = [], scalar_prefetch = 0 : i64, scratch_operands = 0 : i64, tpu.core_type = #tpu.core_type<tc>} {
    %c0 = arith.constant 0 : index
    %c0_0 = arith.constant 0 : index
    %c0_1 = arith.constant 0 : index
    %0 = vector.load %arg0[%c0, %c0_0, %c0_1] : memref<2x8x12xf32, #tpu.memory_space<vmem>>, vector<2x8x12xf32>
    %1 = vector.shape_cast %0 : vector<2x8x12xf32> to vector<16x12xf32>
    %c0_2 = arith.constant 0 : index
    %c0_3 = arith.constant 0 : index
    %2 = vector.load %arg3[%c0_2, %c0_3] : memref<12x128xf32, #tpu.memory_space<vmem>>, vector<12x128xf32>
    %cst = arith.constant dense<0.000000e+00> : vector<16x128xf32>
    %3 = tpu.matmul %1, %2, %cst {dimension_numbers = #tpu.dot_dimension_numbers<[1], [0], [0], [1], [0, 0, 1, 1], [], []>} : vector<16x12xf32>, vector<12x128xf32>, vector<16x128xf32> -> vector<16x128xf32>
    %c0_4 = arith.constant 0 : index
    %c0_5 = arith.constant 0 : index
    %c0_6 = arith.constant 0 : index
    %4 = vector.load %arg1[%c0_4, %c0_5, %c0_6] : memref<2x8x4xf32, #tpu.memory_space<vmem>>, vector<2x8x4xf32>
    %5 = vector.shape_cast %4 : vector<2x8x4xf32> to vector<16x4xf32>
    %c0_7 = arith.constant 0 : index
    %c0_8 = arith.constant 0 : index
    %6 = vector.load %arg4[%c0_7, %c0_8] : memref<4x128xf32, #tpu.memory_space<vmem>>, vector<4x128xf32>
    %cst_9 = arith.constant dense<0.000000e+00> : vector<16x128xf32>
    %7 = tpu.matmul %5, %6, %cst_9 {dimension_numbers = #tpu.dot_dimension_numbers<[1], [0], [0], [1], [0, 0, 1, 1], [], []>} : vector<16x4xf32>, vector<4x128xf32>, vector<16x128xf32> -> vector<16x128xf32>
    %8 = arith.addf %3, %7 : vector<16x128xf32>
    %c0_10 = arith.constant 0 : index
    %c0_11 = arith.constant 0 : index
    %c0_12 = arith.constant 0 : index
    %9 = vector.load %arg2[%c0_10, %c0_11, %c0_12] : memref<2x8x12xf32, #tpu.memory_space<vmem>>, vector<2x8x12xf32>
    %10 = vector.shape_cast %9 : vector<2x8x12xf32> to vector<16x12xf32>
    %c0_13 = arith.constant 0 : index
    %c0_14 = arith.constant 0 : index
    %11 = vector.load %arg5[%c0_13, %c0_14] : memref<12x128xf32, #tpu.memory_space<vmem>>, vector<12x128xf32>
    %cst_15 = arith.constant dense<0.000000e+00> : vector<16x128xf32>
    %12 = tpu.matmul %10, %11, %cst_15 {dimension_numbers = #tpu.dot_dimension_numbers<[1], [0], [0], [1], [0, 0, 1, 1], [], []>} : vector<16x12xf32>, vector<12x128xf32>, vector<16x128xf32> -> vector<16x128xf32>
    %13 = arith.addf %8, %12 : vector<16x128xf32>
    %c0_16 = arith.constant 0 : index
    %c0_17 = arith.constant 0 : index
    %14 = vector.load %arg6[%c0_16, %c0_17] : memref<1x128xf32, #tpu.memory_space<vmem>>, vector<1x128xf32>
    %15 = vector.broadcast %14 : vector<1x128xf32> to vector<16x128xf32>
    %16 = arith.addf %13, %15 : vector<16x128xf32>
    %17 = vector.shape_cast %16 : vector<16x128xf32> to vector<2x8x128xf32>
    %c0_18 = arith.constant 0 : index
    %c0_19 = arith.constant 0 : index
    %c0_20 = arith.constant 0 : index
    %18 = vector.load %arg7[%c0_18, %c0_19, %c0_20] : memref<2x8x128xf32, #tpu.memory_space<vmem>>, vector<2x8x128xf32>
    tpu.vector_store %arg7[%c0_18, %c0_19, %c0_20], %17 {strides = array<i32>} : memref<2x8x128xf32, #tpu.memory_space<vmem>>, vector<2x8x128xf32>,
    return
  }
}

</mosaic_0001>

<llo_original>
// kernel: tpu_custom_call.1
$region0: #{tpu_custom_call.1}
  #allocation0 [shape = 'u32[]', space=smem, size = 0x4, offset = 0x4, fixed_abs, tag = 'smem constant byte address 0x4 - core index']
  #allocation1 [shape = 'u32[144,128]{1,0:T(1,128)}', space=vmem, size = 0x12000, scoped, tag = 'internal scratch']
  %s0 = inlined_call_operand.vmem [shape: f32[2,8,12], index: 0, kind: input, shape index: {}]
  %s1 = inlined_call_operand.vmem [shape: f32[2,8,4], index: 1, kind: input, shape index: {}]
  %s2 = inlined_call_operand.hbm [shape: f32[2,8,12], index: 2, kind: input, shape index: {}]
  %s3 = inlined_call_operand.vmem [shape: f32[12,128], index: 3, kind: input, shape index: {}]
  %s4 = inlined_call_operand.vmem [shape: f32[4,128], index: 4, kind: input, shape index: {}]
  %s5 = inlined_call_operand.hbm [shape: f32[12,128], index: 5, kind: input, shape index: {}]
  %s6 = inlined_call_operand.vmem [shape: f32[1,128], index: 6, kind: input, shape index: {}]
  %s7 = inlined_call_operand.hbm [shape: f32[2,8,128], index: 7, kind: output, shape index: {}]
  %s8 = sld [smem:[#allocation0]]
  $region46: #{tpu_custom_call.1} parent=0
    _
  %s10 = ssub.s32 1, %s8
  %s11 = scalar_select 0, %s10, %s8
  $region1: #{tpu_custom_call.1} parent=0
    #allocation2 [shape = 'u8[8192]{0}', space=vmem, size = 0x2000, scoped, tag = 'input window, operand 2, single buffered']
    #allocation3 [shape = 's32[1]{0}', space=sflag, size = 0x4, scoped, tag = 'scoped memory for tpu_custom_call.1']
    #allocation4 [shape = 's32[1]{0}', space=sflag, size = 0x4, scoped, tag = 'scoped memory for tpu_custom_call.1']
    #allocation5 [shape = 'u8[8192]{0}', space=vmem, size = 0x2000, scoped, tag = 'input window, operand 5, single buffered']
    #allocation6 [shape = 's32[1]{0}', space=sflag, size = 0x4, scoped, tag = 'scoped memory for tpu_custom_call.1']
    #allocation7 [shape = 'u8[8192]{0}', space=vmem, size = 0x2000, scoped, tag = 'output window, operand 0, single buffered']
    %12 = vsyncpa [#allocation3], 0
    %13 = vsyncpa [#allocation6], 0
    %14 = vsyncpa [#allocation4], 0
    // Predicated region
    $region2: #{tpu_custom_call.1} parent=1 // pred_check
      _
    $region3: #{tpu_custom_call.1} parent=1 // pred_check_branch
      %16 = sbr.rel (0) target = $region5
    $region4: #{tpu_custom_call.1} parent=1 // pred_region
      _
    $region5: #{tpu_custom_call.1} parent=1 // pred_fallthru
      _
    // Predicated region
    $region6: #{tpu_custom_call.1} parent=1 // pred_check
      _
    $region7: #{tpu_custom_call.1} parent=1 // pred_check_branch
      %18 = sbr.rel (0) target = $region9
    $region8: #{tpu_custom_call.1} parent=1 // pred_region
      _
    $region9: #{tpu_custom_call.1} parent=1 // pred_fallthru
      _
    // Predicated region
    $region10: #{tpu_custom_call.1} parent=1 // pred_check
      _
    $region11: #{tpu_custom_call.1} parent=1 // pred_check_branch
      %20 = sbr.rel (0) target = $region13
    $region12: #{tpu_custom_call.1} parent=1 // pred_region
      %s22 = ssub.s32 256, 256
      %23 = vsyncadd [#allocation3], %s22
      %s24 = sshll.u32 [#allocation2], 4
      %s25 = int_to_ptr.vmem [resolvable:$true] %s24
      %30 = dma.hbm_to_vmem [thread:$0]  %s2, 256, %s25, [#allocation3], 128, 128, 8
    $region13: #{tpu_custom_call.1} parent=1 // pred_fallthru
      _
    // Predicated region
    $region14: #{tpu_custom_call.1} parent=1 // pred_check
      _
    $region15: #{tpu_custom_call.1} parent=1 // pred_check_branch
      %32 = sbr.rel (0) target = $region17
    $region16: #{tpu_custom_call.1} parent=1 // pred_region
      _
    $region17: #{tpu_custom_call.1} parent=1 // pred_fallthru
      _
    // Predicated region
    $region18: #{tpu_custom_call.1} parent=1 // pred_check
      _
    $region19: #{tpu_custom_call.1} parent=1 // pred_check_branch
      %34 = sbr.rel (0) target = $region21
    $region20: #{tpu_custom_call.1} parent=1 // pred_region
      _
    $region21: #{tpu_custom_call.1} parent=1 // pred_fallthru
      _
    // Predicated region
    $region22: #{tpu_custom_call.1} parent=1 // pred_check
      _
    $region23: #{tpu_custom_call.1} parent=1 // pred_check_branch
      %36 = sbr.rel (0) target = $region25
    $region24: #{tpu_custom_call.1} parent=1 // pred_region
      %s38 = ssub.s32 256, 256
      %39 = vsyncadd [#allocation6], %s38
      %s40 = sshll.u32 [#allocation5], 4
      %s41 = int_to_ptr.vmem [resolvable:$true] %s40
      %46 = dma.hbm_to_vmem [thread:$0]  %s5, 256, %s41, [#allocation6], 128, 128, 8
    $region25: #{tpu_custom_call.1} parent=1 // pred_fallthru
      _
    // Predicated region
    $region26: #{tpu_custom_call.1} parent=1 // pred_check
      _
    $region27: #{tpu_custom_call.1} parent=1 // pred_check_branch
      %48 = sbr.rel (0) target = $region29
    $region28: #{tpu_custom_call.1} parent=1 // pred_region
      _
    $region29: #{tpu_custom_call.1} parent=1 // pred_fallthru
      _
    // Predicated region
    $region30: #{tpu_custom_call.1} parent=1 // pred_check
      _
    $region31: #{tpu_custom_call.1} parent=1 // pred_check_branch
      %50 = sbr.rel (0) target = $region33
    $region32: #{tpu_custom_call.1} parent=1 // pred_region
      %51 = dma.done [#allocation3], 256
    $region33: #{tpu_custom_call.1} parent=1 // pred_fallthru
      _
    // Predicated region
    $region34: #{tpu_custom_call.1} parent=1 // pred_check
      _
    $region35: #{tpu_custom_call.1} parent=1 // pred_check_branch
      %53 = sbr.rel (0) target = $region37
    $region36: #{tpu_custom_call.1} parent=1 // pred_region
      %54 = dma.done [#allocation6], 256
    $region37: #{tpu_custom_call.1} parent=1 // pred_fallthru
      _
    %v55 = vld [vmem:[%s0] sm:$0xff]
    %v56 = vld [vmem:[%s0 + $0x8] sm:$0xff]
    %v57 = vld [vmem:[%s3] sm:$0xff]
    %v58 = vld [vmem:[%s3 + $0x8] sm:$0xf]
    %v59 = vld [vmem:[%s1] sm:$0xff]
    %v60 = vld [vmem:[%s1 + $0x8] sm:$0xff]
    %v61 = vld [vmem:[%s4] sm:$0xf]
    %vm62 = vcmask 31744
    %v64 = vsel %vm62, %v59, 0
    %v67 = vsel %vm62, %v60, 0
    %vm69 = vcmask 1043456
    %v71 = vsel %vm69, %v61, 0
    %73 = vmatprep.subr.mxu0 0.0
    %74 = vmatpush1.msra.mxu0 %v71
    %75 = vmatprep.subr.mxu0 0.0
    %76 = vmatpush1.msra.mxu0 0.0
    %77 = vmatprep.subr.mxu0 0.0
    %78 = vmatpush1.msra.mxu0 0.0
    %79 = vmatprep.subr.mxu0 0.0
    %80 = vmatpush1.msra.mxu0 0.0
    %81 = vmatprep.subr.mxu0 0.0
    %82 = vmatpush1.msra.mxu0 0.0
    %83 = vmatprep.subr.mxu0 0.0
    %84 = vmatpush1.msra.mxu0 0.0
    %85 = vmatprep.subr.mxu0 0.0
    %86 = vmatpush1.msra.mxu0 0.0
    %87 = vmatprep.subr.mxu0 0.0
    %88 = vmatpush1.msra.mxu0 0.0
    %89 = vmatprep.subr.mxu0 0.0
    %90 = vmatpush1.msra.mxu0 0.0
    %91 = vmatprep.subr.mxu0 0.0
    %92 = vmatpush1.msra.mxu0 0.0
    %93 = vmatprep.subr.mxu0 0.0
    %94 = vmatpush1.msra.mxu0 0.0
    %95 = vmatprep.subr.mxu0 0.0
    %96 = vmatpush1.msra.mxu0 0.0
    %97 = vmatprep.subr.mxu0 0.0
    %98 = vmatpush1.msra.mxu0 0.0
    %99 = vmatprep.subr.mxu0 0.0
    %100 = vmatpush1.msra.mxu0 0.0
    %101 = vmatprep.subr.mxu0 0.0
    %102 = vmatpush1.msra.mxu0 0.0
    %103 = vmatprep.subr.mxu0 0.0
    %104 = vmatpush1.msra.mxu0 0.0
    %105 = vmatprep.subr.mxu0 0.0
    %106 = vmatpush1.msra.mxu0 0.0
    %107 = vmatprep.subr.mxu0 0.0
    %108 = vmatpush1.msra.mxu0 0.0
    %109 = vmatprep.subr.mxu0 0.0
    %110 = vmatpush1.msra.mxu0 0.0
    %111 = vmatprep.subr.mxu0 0.0
    %112 = vmatpush1.msra.mxu0 0.0
    %113 = vmatprep.subr.mxu0 0.0
    %114 = vmatpush1.msra.mxu0 0.0
    %115 = vmatprep.subr.mxu0 0.0
    %116 = vmatpush1.msra.mxu0 0.0
    %117 = vmatprep.subr.mxu0 0.0
    %118 = vmatpush1.msra.mxu0 0.0
    %119 = vmatprep.subr.mxu0 0.0
    %120 = vmatpush1.msra.mxu0 0.0
    %121 = vmatprep.subr.mxu0 0.0
    %122 = vmatpush1.msra.mxu0 0.0
    %123 = vmatprep.subr.mxu0 0.0
    %124 = vmatpush1.msra.mxu0 0.0
    %125 = vmatprep.subr.mxu0 0.0
    %126 = vmatpush1.msra.mxu0 0.0
    %127 = vmatprep.subr.mxu0 0.0
    %128 = vmatpush1.msra.mxu0 0.0
    %129 = vmatprep.subr.mxu0 0.0
    %130 = vmatpush1.msra.mxu0 0.0
    %131 = vmatprep.subr.mxu0 0.0
    %132 = vmatpush1.msra.mxu0 0.0
    %133 = vmatprep.subr.mxu0 0.0
    %134 = vmatpush1.msra.mxu0 0.0
    %135 = vmatprep.subr.mxu0 0.0
    %136 = vmatpush1.msra.mxu0 0.0
    %137 = vmatprep.mubr.f32.mxu0 0.0
    %138 = vmatmul.mubr.f32.gmra.mrb[0].mxu0 %v64
    %v139 = vpop.f32.mrb[0].mxu0
    %v140 = vadd.f32 0.0, %v139
    %v141 = vpop.f32.mrb[0].mxu0
    %142 = vmatprep.mubr.f32.mxu0 0.0
    %143 = vmatmul.mubr.f32.gmra.mrb[0].mxu0 %v67
    %v144 = vpop.f32.mrb[0].mxu0
    %v145 = vadd.f32 0.0, %v144
    %v146 = vpop.f32.mrb[0].mxu0
    %147 = vdwg.mxu0
    %vm148 = vcmask 97280
    %v150 = vsel %vm148, %v55, 0
    %v153 = vsel %vm148, %v56, 0
    %v156 = vsel %vm69, %v58, 0
    %158 = vmatprep.subr.mxu0 0.0
    %159 = vmatpush1.msra.mxu0 %v57
    %160 = vmatprep.subr.mxu0 0.0
    %161 = vmatpush1.msra.mxu0 %v156
    %162 = vmatprep.subr.mxu0 0.0
    %163 = vmatpush1.msra.mxu0 0.0
    %164 = vmatprep.subr.mxu0 0.0
    %165 = vmatpush1.msra.mxu0 0.0
    %166 = vmatprep.subr.mxu0 0.0
    %167 = vmatpush1.msra.mxu0 0.0
    %168 = vmatprep.subr.mxu0 0.0
    %169 = vmatpush1.msra.mxu0 0.0
    %170 = vmatprep.subr.mxu0 0.0
    %171 = vmatpush1.msra.mxu0 0.0
    %172 = vmatprep.subr.mxu0 0.0
    %173 = vmatpush1.msra.mxu0 0.0
    %174 = vmatprep.subr.mxu0 0.0
    %175 = vmatpush1.msra.mxu0 0.0
    %176 = vmatprep.subr.mxu0 0.0
    %177 = vmatpush1.msra.mxu0 0.0
    %178 = vmatprep.subr.mxu0 0.0
    %179 = vmatpush1.msra.mxu0 0.0
    %180 = vmatprep.subr.mxu0 0.0
    %181 = vmatpush1.msra.mxu0 0.0
    %182 = vmatprep.subr.mxu0 0.0
    %183 = vmatpush1.msra.mxu0 0.0
    %184 = vmatprep.subr.mxu0 0.0
    %185 = vmatpush1.msra.mxu0 0.0
    %186 = vmatprep.subr.mxu0 0.0
    %187 = vmatpush1.msra.mxu0 0.0
    %188 = vmatprep.subr.mxu0 0.0
    %189 = vmatpush1.msra.mxu0 0.0
    %190 = vmatprep.subr.mxu0 0.0
    %191 = vmatpush1.msra.mxu0 0.0
    %192 = vmatprep.subr.mxu0 0.0
    %193 = vmatpush1.msra.mxu0 0.0
    %194 = vmatprep.subr.mxu0 0.0
    %195 = vmatpush1.msra.mxu0 0.0
    %196 = vmatprep.subr.mxu0 0.0
    %197 = vmatpush1.msra.mxu0 0.0
    %198 = vmatprep.subr.mxu0 0.0
    %199 = vmatpush1.msra.mxu0 0.0
    %200 = vmatprep.subr.mxu0 0.0
    %201 = vmatpush1.msra.mxu0 0.0
    %202 = vmatprep.subr.mxu0 0.0
    %203 = vmatpush1.msra.mxu0 0.0
    %204 = vmatprep.subr.mxu0 0.0
    %205 = vmatpush1.msra.mxu0 0.0
    %206 = vmatprep.subr.mxu0 0.0
    %207 = vmatpush1.msra.mxu0 0.0
    %208 = vmatprep.subr.mxu0 0.0
    %209 = vmatpush1.msra.mxu0 0.0
    %210 = vmatprep.subr.mxu0 0.0
    %211 = vmatpush1.msra.mxu0 0.0
    %212 = vmatprep.subr.mxu0 0.0
    %213 = vmatpush1.msra.mxu0 0.0
    %214 = vmatprep.subr.mxu0 0.0
    %215 = vmatpush1.msra.mxu0 0.0
    %216 = vmatprep.subr.mxu0 0.0
    %217 = vmatpush1.msra.mxu0 0.0
    %218 = vmatprep.subr.mxu0 0.0
    %219 = vmatpush1.msra.mxu0 0.0
    %220 = vmatprep.subr.mxu0 0.0
    %221 = vmatpush1.msra.mxu0 0.0
    %222 = vmatprep.mubr.f32.mxu0 0.0
    %223 = vmatmul.mubr.f32.gmra.mrb[0].mxu0 %v150
    %v224 = vpop.f32.mrb[0].mxu0
    %v225 = vadd.f32 %v140, %v224
    %v226 = vpop.f32.mrb[0].mxu0
    %227 = vmatprep.mubr.f32.mxu0 0.0
    %228 = vmatmul.mubr.f32.gmra.mrb[0].mxu0 %v153
    %v229 = vpop.f32.mrb[0].mxu0
    %v230 = vadd.f32 %v145, %v229
    %v231 = vpop.f32.mrb[0].mxu0
    %232 = vdwg.mxu0
    %v233 = vld [vmem:[#allocation2] sm:$0xff]
    %v234 = vld [vmem:[#allocation2 + $0x8] sm:$0xff]
    %v235 = vld [vmem:[#allocation5] sm:$0xff]
    %v236 = vld [vmem:[#allocation5 + $0x8] sm:$0xf]
    %v238 = vsel %vm148, %v233, 0
    %v241 = vsel %vm148, %v234, 0
    %v244 = vsel %vm69, %v236, 0
    %246 = vmatprep.subr.mxu0 0.0
    %247 = vmatpush1.msra.mxu0 %v235
    %248 = vmatprep.subr.mxu0 0.0
    %249 = vmatpush1.msra.mxu0 %v244
    %250 = vmatprep.subr.mxu0 0.0
    %251 = vmatpush1.msra.mxu0 0.0
    %252 = vmatprep.subr.mxu0 0.0
    %253 = vmatpush1.msra.mxu0 0.0
    %254 = vmatprep.subr.mxu0 0.0
    %255 = vmatpush1.msra.mxu0 0.0
    %256 = vmatprep.subr.mxu0 0.0
    %257 = vmatpush1.msra.mxu0 0.0
    %258 = vmatprep.subr.mxu0 0.0
    %259 = vmatpush1.msra.mxu0 0.0
    %260 = vmatprep.subr.mxu0 0.0
    %261 = vmatpush1.msra.mxu0 0.0
    %262 = vmatprep.subr.mxu0 0.0
    %263 = vmatpush1.msra.mxu0 0.0
    %264 = vmatprep.subr.mxu0 0.0
    %265 = vmatpush1.msra.mxu0 0.0
    %266 = vmatprep.subr.mxu0 0.0
    %267 = vmatpush1.msra.mxu0 0.0
    %268 = vmatprep.subr.mxu0 0.0
    %269 = vmatpush1.msra.mxu0 0.0
    %270 = vmatprep.subr.mxu0 0.0
    %271 = vmatpush1.msra.mxu0 0.0
    %272 = vmatprep.subr.mxu0 0.0
    %273 = vmatpush1.msra.mxu0 0.0
    %274 = vmatprep.subr.mxu0 0.0
    %275 = vmatpush1.msra.mxu0 0.0
    %276 = vmatprep.subr.mxu0 0.0
    %277 = vmatpush1.msra.mxu0 0.0
    %278 = vmatprep.subr.mxu0 0.0
    %279 = vmatpush1.msra.mxu0 0.0
    %280 = vmatprep.subr.mxu0 0.0
    %281 = vmatpush1.msra.mxu0 0.0
    %282 = vmatprep.subr.mxu0 0.0
    %283 = vmatpush1.msra.mxu0 0.0
    %284 = vmatprep.subr.mxu0 0.0
    %285 = vmatpush1.msra.mxu0 0.0
    %286 = vmatprep.subr.mxu0 0.0
    %287 = vmatpush1.msra.mxu0 0.0
    %288 = vmatprep.subr.mxu0 0.0
    %289 = vmatpush1.msra.mxu0 0.0
    %290 = vmatprep.subr.mxu0 0.0
    %291 = vmatpush1.msra.mxu0 0.0
    %292 = vmatprep.subr.mxu0 0.0
    %293 = vmatpush1.msra.mxu0 0.0
    %294 = vmatprep.subr.mxu0 0.0
    %295 = vmatpush1.msra.mxu0 0.0
    %296 = vmatprep.subr.mxu0 0.0
    %297 = vmatpush1.msra.mxu0 0.0
    %298 = vmatprep.subr.mxu0 0.0
    %299 = vmatpush1.msra.mxu0 0.0
    %300 = vmatprep.subr.mxu0 0.0
    %301 = vmatpush1.msra.mxu0 0.0
    %302 = vmatprep.subr.mxu0 0.0
    %303 = vmatpush1.msra.mxu0 0.0
    %304 = vmatprep.subr.mxu0 0.0
    %305 = vmatpush1.msra.mxu0 0.0
    %306 = vmatprep.subr.mxu0 0.0
    %307 = vmatpush1.msra.mxu0 0.0
    %308 = vmatprep.subr.mxu0 0.0
    %309 = vmatpush1.msra.mxu0 0.0
    %310 = vmatprep.mubr.f32.mxu0 0.0
    %311 = vmatmul.mubr.f32.gmra.mrb[0].mxu0 %v238
    %v312 = vpop.f32.mrb[0].mxu0
    %v313 = vadd.f32 0.0, %v312
    %v314 = vpop.f32.mrb[0].mxu0
    %315 = vmatprep.mubr.f32.mxu0 0.0
    %316 = vmatmul.mubr.f32.gmra.mrb[0].mxu0 %v241
    %v317 = vpop.f32.mrb[0].mxu0
    %v318 = vadd.f32 0.0, %v317
    %v319 = vpop.f32.mrb[0].mxu0
    %320 = vdwg.mxu0
    %v321 = vadd.f32 %v225, %v313
    %v322 = vadd.f32 %v230, %v318
    %v323 = vld [vmem:[%s6] sm:$0x1]
    %v325 = vlaneseq
    %v326 = vshrl.u32 %v325, 7
    %v327 = vsub.s32 0, %v326
    %v328 = vrot.slane %v323, %v327
    %v330 = vadd.f32 %v321, %v328
    %v331 = vadd.f32 %v322, %v328
    %332 = vst [vmem:[#allocation7] sm:$0xff] %v330
    %333 = vst [vmem:[#allocation7 + $0x8] sm:$0xff] %v331
    // Predicated region
    $region38: #{tpu_custom_call.1} parent=1 // pred_check
      _
    $region39: #{tpu_custom_call.1} parent=1 // pred_check_branch
      %335 = sbr.rel (0) target = $region41
    $region40: #{tpu_custom_call.1} parent=1 // pred_region
      %s337 = ssub.s32 256, 256
      %338 = vsyncadd [#allocation4], %s337
      %s339 = sshll.u32 [#allocation7], 4
      %s340 = int_to_ptr.vmem [resolvable:$true] %s339
      %345 = dma.vmem_to_hbm [thread:$0]  %s340, 256, %s7, [#allocation4], 128, 128, 8
    $region41: #{tpu_custom_call.1} parent=1 // pred_fallthru
      _
    // Predicated region
    $region42: #{tpu_custom_call.1} parent=1 // pred_check
      _
    $region43: #{tpu_custom_call.1} parent=1 // pred_check_branch
      %347 = sbr.rel (0) target = $region45
    $region44: #{tpu_custom_call.1} parent=1 // pred_region
      %348 = dma.done [#allocation4], 256
    $region45: #{tpu_custom_call.1} parent=1 // pred_fallthru
      _
    %349 = vsyncpa [#allocation3], 1
    %350 = vsyncpa [#allocation6], 1
    %351 = vsyncpa [#allocation4], 1

</llo_original>
